<compile_context>
chip_gen: v7x
topology: tpu7x:2x2x1
jax: 0.10.0
libtpu: 0.0.40
codegen_flags: <defaults>
</compile_context>

<pallas_src>
import itertools
import functools

import numpy as np
import jax
import jax.numpy as jnp
from jax.experimental import pallas as pl
from jax.experimental.pallas import tpu as pltpu


# ---------------------------------------------------------------------------
# Pallas kernel: one row-tile of the matching-cost matrix
#   C = w_bbox * L1(out_bbox, tgt_bbox)
#     + w_labels * focal_cost(sigmoid(logits)[:, tgt_labels])
#     + w_giou * (-GIoU(xyxy(out_bbox), xyxy(tgt_bbox)))
# (w_labels is folded into the per-class focal cost; w_bbox is folded into the
#  coordinates on the host side -- GIoU is invariant to that uniform scaling.)
# ---------------------------------------------------------------------------
def _matcher_cost_kernel(logits_ref, onehot_ref, pbox_ref, tgt_pack_ref, cost_ref,
                         *, alpha, gamma, w_labels, w_giou):
    # ---- classification (focal) cost, computed per class on [TN, C_pad] ----
    logits = logits_ref[...].astype(jnp.float32)                 # [TN, Cp]
    prob = jax.nn.sigmoid(logits)                                # [TN, Cp]

    def _pow(x):
        g = float(gamma)
        if g == 2.0:
            return x * x                                         # avoid exp/log pow on EUP
        if g.is_integer() and 1.0 <= g <= 4.0:
            r = x
            for _ in range(int(g) - 1):
                r = r * x
            return r
        return x ** gamma

    neg = (1.0 - alpha) * _pow(prob) * (-jnp.log(1.0 - prob + 1e-8))
    pos = alpha * _pow(1.0 - prob) * (-jnp.log(prob + 1e-8))
    focal = w_labels * (pos - neg)                               # [TN, Cp], weight folded in

    # Single exact f32 gather on the (otherwise idle) MXU:
    #   cost_labels[n, t] = w_labels * focal_cost(prob[n, tgt_labels[t]])
    cost_labels = jnp.dot(focal, onehot_ref[...],
                          preferred_element_type=jnp.float32)    # [TN, Tp]

    # ---- box costs (all coordinates already scaled by w_bbox) -------------
    pb = pbox_ref[...]                                           # [TN, 9] f32
    tp = tgt_pack_ref[...]                                       # [9, Tp] f32

    ocx, ocy, ow, oh = pb[:, 0:1], pb[:, 1:2], pb[:, 2:3], pb[:, 3:4]       # [TN, 1]
    ox0, oy0, ox1, oy1 = pb[:, 4:5], pb[:, 5:6], pb[:, 6:7], pb[:, 7:8]
    oarea = pb[:, 8:9]
    tcx, tcy, tw, th = tp[0:1, :], tp[1:2, :], tp[2:3, :], tp[3:4, :]       # [1, Tp]
    tx0, ty0, tx1, ty1 = tp[4:5, :], tp[5:6, :], tp[6:7, :], tp[7:8, :]
    tarea = tp[8:9, :]

    # L1 cdist (p=1) on (cx, cy, w, h); w_bbox already applied via the coords.
    cost_bbox = (jnp.abs(ocx - tcx) + jnp.abs(ocy - tcy)
                 + jnp.abs(ow - tw) + jnp.abs(oh - th))          # [TN, Tp]

    # GIoU on precomputed xyxy / areas (scale-invariant, so w_bbox scaling is benign).
    lt_x = jnp.maximum(ox0, tx0)
    lt_y = jnp.maximum(oy0, ty0)
    rb_x = jnp.minimum(ox1, tx1)
    rb_y = jnp.minimum(oy1, ty1)
    inter = jnp.maximum(rb_x - lt_x, 0.0) * jnp.maximum(rb_y - lt_y, 0.0)
    union = oarea + tarea - inter
    iou = inter * pl.reciprocal(union, approx=True)

    cx0 = jnp.minimum(ox0, tx0)
    cy0 = jnp.minimum(oy0, ty0)
    cx1 = jnp.maximum(ox1, tx1)
    cy1 = jnp.maximum(oy1, ty1)
    area_c = jnp.maximum(cx1 - cx0, 0.0) * jnp.maximum(cy1 - cy0, 0.0)
    giou = iou - (area_c - union) * pl.reciprocal(area_c, approx=True)

    # cost_giou = -giou, weighted by w_giou; everything else pre-weighted.
    cost_ref[...] = cost_labels + cost_bbox - w_giou * giou


def _round_up(a, b):
    return ((a + b - 1) // b) * b


def compute_cost_matrix(pred_logits, pred_boxes, tgt_labels, tgt_boxes,
                        *, num_classes, alpha=0.25, gamma=2.0,
                        w_labels=2.0, w_bbox=5.0, w_giou=2.0, tile_n=1024):
    """Returns the [bs, num_queries, T] matching cost matrix (float32)."""
    bs, num_queries, C = pred_logits.shape
    N = bs * num_queries
    T = int(tgt_boxes.shape[0])

    # Lane-dense target padding (static 128-wide buckets -> unmasked vst, stable recompiles).
    T_pad = max(128, _round_up(T, 128))
    # Pad classes to a multiple of 16 (clean sublane packing / matmul K for bf16 or f32 logits).
    C_pad = _round_up(C, 16)

    # Row tile: as large as practical (per-grid-step overhead ~0.35us dominates small grids), but
    #   - keep >= 2 grid steps when possible so v7x's two TensorCores both get work,
    #   - bound the ~12 live [TILE_N, T_pad] f32 temporaries to ~40 MiB of VMEM.
    n_rows8 = _round_up(N, 8)
    half_rows = _round_up(max(8, (n_rows8 + 1) // 2), 8)
    max_rows_by_vmem = max(8, ((40 * 2**20) // (12 * T_pad * 4)) // 8 * 8)
    TILE_N = max(8, min(tile_n, half_rows, max_rows_by_vmem))
    N_pad = _round_up(N, TILE_N)

    # Logits kept in their native dtype (kernel casts to f32); pad rows and classes with zeros
    # (padded classes have zero one-hot rows, so they never reach the output).
    logits2d = pred_logits.reshape(N, C)
    logits2d = jnp.pad(logits2d, ((0, N_pad - N), (0, C_pad - C)))

    # Prediction boxes: pad rows with a benign valid dummy, scale by w_bbox, precompute xyxy/area.
    out_bbox = pred_boxes.reshape(N, 4).astype(jnp.float32)
    if N_pad > N:
        dummy_rows = jnp.tile(jnp.array([[0.5, 0.5, 0.5, 0.5]], jnp.float32), (N_pad - N, 1))
        out_bbox = jnp.concatenate([out_bbox, dummy_rows], axis=0)
    ob = out_bbox * w_bbox
    ocx, ocy, ow, oh = ob[:, 0], ob[:, 1], ob[:, 2], ob[:, 3]
    ox0, oy0 = ocx - 0.5 * ow, ocy - 0.5 * oh
    ox1, oy1 = ocx + 0.5 * ow, ocy + 0.5 * oh
    pbox = jnp.stack([ocx, ocy, ow, oh, ox0, oy0, ox1, oy1, ow * oh], axis=1)  # [N_pad, 9]

    # Targets: pad columns with a VALID dummy box (nonzero w/h) and class 0 so no NaN/Inf is
    # produced; padded columns are sliced off before assignment. Scale by w_bbox, pack constants.
    tgt_boxes_f = tgt_boxes.astype(jnp.float32)
    tgt_labels_i = tgt_labels.astype(jnp.int32)
    if T_pad > T:
        dummy_box = jnp.tile(jnp.array([[0.5, 0.5, 0.5, 0.5]], jnp.float32), (T_pad - T, 1))
        tgt_boxes_f = jnp.concatenate([tgt_boxes_f, dummy_box], axis=0)
        tgt_labels_i = jnp.concatenate(
            [tgt_labels_i, jnp.zeros((T_pad - T,), jnp.int32)], axis=0)
    tb = tgt_boxes_f * w_bbox
    tcx, tcy, tw, th = tb[:, 0], tb[:, 1], tb[:, 2], tb[:, 3]
    tx0, ty0 = tcx - 0.5 * tw, tcy - 0.5 * th
    tx1, ty1 = tcx + 0.5 * tw, tcy + 0.5 * th
    tgt_pack = jnp.stack([tcx, tcy, tw, th, tx0, ty0, tx1, ty1, tw * th], axis=0)  # [9, T_pad]

    # Exact f32 one-hot for the single MXU gather of the per-class focal cost.
    onehot = jax.nn.one_hot(tgt_labels_i, C_pad, dtype=jnp.float32).T             # [C_pad, T_pad]

    kernel = functools.partial(_matcher_cost_kernel,
                               alpha=alpha, gamma=gamma,
                               w_labels=w_labels, w_giou=w_giou)

    grid = (pl.cdiv(N_pad, TILE_N),)

    # VMEM budget: double-buffered tiled operands + resident small operands (counted once)
    # + live [TILE_N, T_pad] temporaries. Clamped to stay within v7x's 64 MiB physical VMEM.
    lg_item = logits2d.dtype.itemsize
    lane_C = max(C_pad, 128)
    bytes_tiled = (2 * TILE_N * lane_C * lg_item      # logits tile (lane-padded), double buffered
                   + 2 * TILE_N * 128 * 4             # packed pred boxes (lane-padded), double buf
                   + 2 * TILE_N * T_pad * 4)          # output tile, double buffered
    bytes_resident = (_round_up(C_pad, 8) * T_pad * 4 # f32 one-hot, resident
                      + 16 * T_pad * 4)               # packed targets (sublane-padded), resident
    bytes_tmp = 12 * TILE_N * T_pad * 4 + 6 * TILE_N * lane_C * 4
    vmem_limit = int(min(64 * 1024 * 1024,
                         max(16 * 1024 * 1024,
                             2 * (bytes_tiled + bytes_resident + bytes_tmp))))

    # Advisory cost estimate so XLA overlaps the surrounding pad/one_hot ops & D2H copy.
    flops = int(2 * N_pad * T_pad * C_pad          # one-hot gather matmul
                + 40 * N_pad * T_pad               # L1 + GIoU elementwise
                + 14 * N_pad * C_pad)              # per-class focal cost
    transcendentals = int(3 * N_pad * C_pad + 2 * N_pad * T_pad)
    bytes_accessed = int(logits2d.size * lg_item + onehot.size * 4
                         + pbox.size * 4 + tgt_pack.size * 4 + N_pad * T_pad * 4)
    cost_est = pl.CostEstimate(flops=flops, transcendentals=transcendentals,
                               bytes_accessed=bytes_accessed)

    cost = pl.pallas_call(
        kernel,
        out_shape=jax.ShapeDtypeStruct((N_pad, T_pad), jnp.float32),
        grid_spec=pltpu.PrefetchScalarGridSpec(
            num_scalar_prefetch=0,
            grid=grid,
            in_specs=[
                pl.BlockSpec((TILE_N, C_pad), lambda i: (i, 0)),   # logits: tiled over rows
                pl.BlockSpec((C_pad, T_pad), lambda i: (0, 0)),    # f32 one-hot: resident
                pl.BlockSpec((TILE_N, 9), lambda i: (i, 0)),       # packed pred boxes: tiled
                pl.BlockSpec((9, T_pad), lambda i: (0, 0)),        # packed targets: resident
            ],
            out_specs=pl.BlockSpec((TILE_N, T_pad), lambda i: (i, 0)),
        ),
        compiler_params=pltpu.CompilerParams(
            dimension_semantics=("parallel",),                     # megacore shard on v7x
            vmem_limit_bytes=vmem_limit,
        ),
        cost_estimate=cost_est,
    )(logits2d, onehot, pbox, tgt_pack)

    # Explicitly drop padded rows/columns before anything downstream sees them.
    return cost[:N, :T].reshape(bs, num_queries, T)


# ---------------------------------------------------------------------------
# Host-side optimal assignment (tiny shapes -> brute force, same optimum and
# output convention as scipy.optimize.linear_sum_assignment with rows >= cols)
# ---------------------------------------------------------------------------
def _linear_sum_assignment_small(cost):
    n_rows, n_cols = cost.shape
    assert n_rows >= n_cols, "expects num_queries >= num_targets"
    best_rows, best_cost = None, np.inf
    col_range = list(range(n_cols))
    for perm in itertools.permutations(range(n_rows), n_cols):
        c = cost[list(perm), col_range].sum()
        if c < best_cost:
            best_cost, best_rows = c, perm
    rows = np.asarray(best_rows, dtype=np.int64)
    cols = np.arange(n_cols, dtype=np.int64)
    order = np.argsort(rows)
    return rows[order], cols[order]


def hungarian_matcher_forward(outputs, targets, *, num_classes,
                              weight_dict, gamma=2.0, alpha=0.25):
    """Mirror of HungarianMatcher.forward. Returns list of (index_i, index_j)."""
    tgt_boxes = jnp.concatenate([t["boxes"] for t in targets], axis=0)
    tgt_labels = jnp.concatenate([t["labels"] for t in targets], axis=0)

    C = compute_cost_matrix(
        outputs["pred_logits"], outputs["pred_boxes"], tgt_labels, tgt_boxes,
        num_classes=num_classes, alpha=alpha, gamma=gamma,
        w_labels=weight_dict["cost_labels"],
        w_bbox=weight_dict["cost_bbox"],
        w_giou=weight_dict["cost_giou"],
    )
    C = np.asarray(jax.block_until_ready(C))                            # -> host (as .cpu())

    sizes = [int(t["boxes"].shape[0]) for t in targets]
    indices = []
    col_start = 0
    for i, s in enumerate(sizes):
        sub = C[i, :, col_start:col_start + s]
        indices.append(_linear_sum_assignment_small(sub))
        col_start += s
    return indices


# ---------------------------------------------------------------------------
# Pure-numpy reference of the cost matrix, for correctness checking.
# ---------------------------------------------------------------------------
def _cost_matrix_ref(pred_logits, pred_boxes, tgt_labels, tgt_boxes,
                     alpha, gamma, w_labels, w_bbox, w_giou):
    pred_logits = np.asarray(pred_logits, np.float32)
    pred_boxes = np.asarray(pred_boxes, np.float32)
    tgt_labels = np.asarray(tgt_labels)
    tgt_boxes = np.asarray(tgt_boxes, np.float32)
    bs, nq, _ = pred_logits.shape
    out_bbox = pred_boxes.reshape(bs * nq, 4)
    cost_bbox = np.abs(out_bbox[:, None, :] - tgt_boxes[None, :, :]).sum(-1)

    def to_xyxy(b):
        cx, cy, w, h = b[..., 0], b[..., 1], b[..., 2], b[..., 3]
        return np.stack([cx - 0.5 * w, cy - 0.5 * h, cx + 0.5 * w, cy + 0.5 * h], -1)

    ob, tb = to_xyxy(out_bbox), to_xyxy(tgt_boxes)
    area_o = (ob[:, 2] - ob[:, 0]) * (ob[:, 3] - ob[:, 1])
    area_t = (tb[:, 2] - tb[:, 0]) * (tb[:, 3] - tb[:, 1])
    lt = np.maximum(ob[:, None, :2], tb[None, :, :2])
    rb = np.minimum(ob[:, None, 2:], tb[None, :, 2:])
    wh = np.clip(rb - lt, 0, None)
    inter = wh[..., 0] * wh[..., 1]
    union = area_o[:, None] + area_t[None, :] - inter
    iou = inter / union
    clt = np.minimum(ob[:, None, :2], tb[None, :, :2])
    crb = np.maximum(ob[:, None, 2:], tb[None, :, 2:])
    cwh = np.clip(crb - clt, 0, None)
    area_c = cwh[..., 0] * cwh[..., 1]
    cost_giou = -(iou - (area_c - union) / area_c)

    prob = 1.0 / (1.0 + np.exp(-pred_logits.reshape(bs * nq, -1)))
    out_prob = prob[:, tgt_labels]
    neg = (1 - alpha) * out_prob ** gamma * -np.log(1 - out_prob + 1e-8)
    pos = alpha * (1 - out_prob) ** gamma * -np.log(out_prob + 1e-8)
    cost_labels = pos - neg
    C = w_bbox * cost_bbox + w_labels * cost_labels + w_giou * cost_giou
    return C.reshape(bs, nq, -1)


if __name__ == "__main__":
    bs, num_queries, num_classes = 2, 8, 16
    sizes = [3, 5]                                    # targets per image -> T = 8
    weight_dict = {"cost_labels": 2.0, "cost_bbox": 5.0, "cost_giou": 2.0}
    gamma, alpha = 2.0, 0.25

    key = jax.random.PRNGKey(0)
    k_logit, k_box, k_tl, k_tc, k_ts = jax.random.split(key, 5)

    pred_logits = jax.random.normal(k_logit, (bs, num_queries, num_classes), jnp.float32)
    # predicted boxes in cxcywh, positive sizes
    pb_center = jax.random.uniform(k_box, (bs, num_queries, 2), minval=0.2, maxval=0.8)
    pb_wh = jax.random.uniform(k_box, (bs, num_queries, 2), minval=0.05, maxval=0.3)
    pred_boxes = jnp.concatenate([pb_center, pb_wh], axis=-1)

    targets = []
    for i, s in enumerate(sizes):
        kl, kc, ks = (jax.random.fold_in(k_tl, i),
                      jax.random.fold_in(k_tc, i),
                      jax.random.fold_in(k_ts, i))
        labels = jax.random.randint(kl, (s,), 0, num_classes, dtype=jnp.int32)
        centers = jax.random.uniform(kc, (s, 2), minval=0.2, maxval=0.8)
        whs = jax.random.uniform(ks, (s, 2), minval=0.05, maxval=0.3)
        targets.append({"labels": labels, "boxes": jnp.concatenate([centers, whs], -1)})

    outputs = {"pred_logits": pred_logits, "pred_boxes": pred_boxes}

    # --- run the Pallas cost-matrix kernel and check against f32 reference ---
    tgt_boxes_all = jnp.concatenate([t["boxes"] for t in targets], 0)
    tgt_labels_all = jnp.concatenate([t["labels"] for t in targets], 0)
    C_kernel = compute_cost_matrix(
        pred_logits, pred_boxes, tgt_labels_all, tgt_boxes_all,
        num_classes=num_classes, alpha=alpha, gamma=gamma,
        w_labels=weight_dict["cost_labels"], w_bbox=weight_dict["cost_bbox"],
        w_giou=weight_dict["cost_giou"])
    C_kernel = np.asarray(jax.block_until_ready(C_kernel))
    C_ref = _cost_matrix_ref(pred_logits, pred_boxes, tgt_labels_all, tgt_boxes_all,
                             alpha, gamma, weight_dict["cost_labels"],
                             weight_dict["cost_bbox"], weight_dict["cost_giou"])
    # The class gather is now an exact f32 one-hot matmul; remaining approximation is the
    # w_bbox coordinate folding (f32 rounding) and the two approximate EUP reciprocals in GIoU
    # (assignment-insensitive), so the tolerance is tightened vs the previous bf16 version.
    assert C_kernel.shape == C_ref.shape, "cost matrix shape mismatch"
    assert np.all(np.isfinite(C_kernel)), "non-finite values in kernel cost matrix"
    assert np.allclose(C_kernel, C_ref, rtol=2e-2, atol=2e-2), "cost matrix mismatch"

    # --- full forward (kernel + host assignment) ---
    indices = hungarian_matcher_forward(
        outputs, targets, num_classes=num_classes,
        weight_dict=weight_dict, gamma=gamma, alpha=alpha)
    for (ri, ci), s in zip(indices, sizes):
        assert len(ri) == len(ci) == min(num_queries, s)
        assert ri.dtype == np.int64 and ci.dtype == np.int64

    print("KERNEL_OK")
</pallas_src>

<mosaic_0001>
module attributes {stable_mosaic.version = 11 : i64} {
  func.func @_matcher_cost_kernel(%arg0: i32, %arg1: memref<8x16xf32, #tpu.memory_space<vmem>>, %arg2: memref<16x128xf32, #tpu.memory_space<vmem>>, %arg3: memref<8x9xf32, #tpu.memory_space<vmem>>, %arg4: memref<9x128xf32, #tpu.memory_space<vmem>>, %arg5: memref<8x128xf32, #tpu.memory_space<vmem>>) attributes {dimension_semantics = [#tpu.dimension_semantics<parallel>], iteration_bounds = array<i64: 2>, scalar_prefetch = 0 : i64, scratch_operands = 0 : i64, tpu.core_type = #tpu.core_type<tc>, window_params = [{transform_indices = @transform_0, window_bounds = array<i64: 8, 16>}, {pipeline_mode = #tpu.pipeline_mode<synchronous>, transform_indices = @transform_1, window_bounds = array<i64: 16, 128>}, {transform_indices = @transform_2, window_bounds = array<i64: 8, 9>}, {pipeline_mode = #tpu.pipeline_mode<synchronous>, transform_indices = @transform_3, window_bounds = array<i64: 9, 128>}, {transform_indices = @transform_4, window_bounds = array<i64: 8, 128>}]} {
    %c0 = arith.constant 0 : index
    %c0_0 = arith.constant 0 : index
    %0 = vector.load %arg1[%c0, %c0_0] : memref<8x16xf32, #tpu.memory_space<vmem>>, vector<8x16xf32>
    %1 = arith.negf %0 : vector<8x16xf32>
    %2 = math.exp %1 : vector<8x16xf32>
    %cst = arith.constant 1.000000e+00 : f32
    %3 = vector.broadcast %cst : f32 to vector<8x16xf32>
    %4 = arith.addf %3, %2 : vector<8x16xf32>
    %5 = arith.divf %3, %4 : vector<8x16xf32>
    %6 = arith.mulf %5, %5 : vector<8x16xf32>
    %cst_1 = arith.constant 7.500000e-01 : f32
    %7 = vector.broadcast %cst_1 : f32 to vector<8x16xf32>
    %8 = arith.mulf %7, %6 : vector<8x16xf32>
    %cst_2 = arith.constant 1.000000e+00 : f32
    %9 = vector.broadcast %cst_2 : f32 to vector<8x16xf32>
    %10 = arith.subf %9, %5 : vector<8x16xf32>
    %cst_3 = arith.constant 9.99999993E-9 : f32
    %11 = vector.broadcast %cst_3 : f32 to vector<8x16xf32>
    %12 = arith.addf %10, %11 : vector<8x16xf32>
    %13 = math.log %12 : vector<8x16xf32>
    %cst_4 = arith.constant 0.000000e+00 : f32
    %14 = vector.broadcast %cst_4 : f32 to vector<8x16xf32>
    %15 = arith.subf %14, %13 : vector<8x16xf32>
    %16 = arith.mulf %8, %15 : vector<8x16xf32>
    %cst_5 = arith.constant 1.000000e+00 : f32
    %17 = vector.broadcast %cst_5 : f32 to vector<8x16xf32>
    %18 = arith.subf %17, %5 : vector<8x16xf32>
    %19 = arith.mulf %18, %18 : vector<8x16xf32>
    %cst_6 = arith.constant 2.500000e-01 : f32
    %20 = vector.broadcast %cst_6 : f32 to vector<8x16xf32>
    %21 = arith.mulf %20, %19 : vector<8x16xf32>
    %cst_7 = arith.constant 9.99999993E-9 : f32
    %22 = vector.broadcast %cst_7 : f32 to vector<8x16xf32>
    %23 = arith.addf %5, %22 : vector<8x16xf32>
    %24 = math.log %23 : vector<8x16xf32>
    %cst_8 = arith.constant 0.000000e+00 : f32
    %25 = vector.broadcast %cst_8 : f32 to vector<8x16xf32>
    %26 = arith.subf %25, %24 : vector<8x16xf32>
    %27 = arith.mulf %21, %26 : vector<8x16xf32>
    %28 = arith.subf %27, %16 : vector<8x16xf32>
    %cst_9 = arith.constant 2.000000e+00 : f32
    %29 = vector.broadcast %cst_9 : f32 to vector<8x16xf32>
    %30 = arith.mulf %29, %28 : vector<8x16xf32>
    %c0_10 = arith.constant 0 : index
    %c0_11 = arith.constant 0 : index
    %31 = vector.load %arg2[%c0_10, %c0_11] : memref<16x128xf32, #tpu.memory_space<vmem>>, vector<16x128xf32>
    %cst_12 = arith.constant dense<0.000000e+00> : vector<8x128xf32>
    %32 = tpu.matmul %30, %31, %cst_12 {dimension_numbers = #tpu.dot_dimension_numbers<[1], [0], [0], [1], [0, 0, 1, 1], [], []>} : vector<8x16xf32>, vector<16x128xf32>, vector<8x128xf32> -> vector<8x128xf32>
    %c0_13 = arith.constant 0 : index
    %c0_14 = arith.constant 0 : index
    %33 = vector.load %arg3[%c0_13, %c0_14] : memref<8x9xf32, #tpu.memory_space<vmem>>, vector<8x9xf32>
    %c0_15 = arith.constant 0 : index
    %c0_16 = arith.constant 0 : index
    %34 = vector.load %arg4[%c0_15, %c0_16] : memref<9x128xf32, #tpu.memory_space<vmem>>, vector<9x128xf32>
    %35 = vector.extract_strided_slice %33 {offsets = [0, 0], sizes = [8, 1], strides = [1, 1]} : vector<8x9xf32> to vector<8x1xf32>
    %36 = vector.extract_strided_slice %33 {offsets = [0, 1], sizes = [8, 1], strides = [1, 1]} : vector<8x9xf32> to vector<8x1xf32>
    %37 = vector.extract_strided_slice %33 {offsets = [0, 2], sizes = [8, 1], strides = [1, 1]} : vector<8x9xf32> to vector<8x1xf32>
    %38 = vector.extract_strided_slice %33 {offsets = [0, 3], sizes = [8, 1], strides = [1, 1]} : vector<8x9xf32> to vector<8x1xf32>
    %39 = vector.extract_strided_slice %33 {offsets = [0, 4], sizes = [8, 1], strides = [1, 1]} : vector<8x9xf32> to vector<8x1xf32>
    %40 = vector.extract_strided_slice %33 {offsets = [0, 5], sizes = [8, 1], strides = [1, 1]} : vector<8x9xf32> to vector<8x1xf32>
    %41 = vector.extract_strided_slice %33 {offsets = [0, 6], sizes = [8, 1], strides = [1, 1]} : vector<8x9xf32> to vector<8x1xf32>
    %42 = vector.extract_strided_slice %33 {offsets = [0, 7], sizes = [8, 1], strides = [1, 1]} : vector<8x9xf32> to vector<8x1xf32>
    %43 = vector.extract_strided_slice %33 {offsets = [0, 8], sizes = [8, 1], strides = [1, 1]} : vector<8x9xf32> to vector<8x1xf32>
    %44 = vector.extract_strided_slice %34 {offsets = [0, 0], sizes = [1, 128], strides = [1, 1]} : vector<9x128xf32> to vector<1x128xf32>
    %45 = vector.extract_strided_slice %34 {offsets = [1, 0], sizes = [1, 128], strides = [1, 1]} : vector<9x128xf32> to vector<1x128xf32>
    %46 = vector.extract_strided_slice %34 {offsets = [2, 0], sizes = [1, 128], strides = [1, 1]} : vector<9x128xf32> to vector<1x128xf32>
    %47 = vector.extract_strided_slice %34 {offsets = [3, 0], sizes = [1, 128], strides = [1, 1]} : vector<9x128xf32> to vector<1x128xf32>
    %48 = vector.extract_strided_slice %34 {offsets = [4, 0], sizes = [1, 128], strides = [1, 1]} : vector<9x128xf32> to vector<1x128xf32>
    %49 = vector.extract_strided_slice %34 {offsets = [5, 0], sizes = [1, 128], strides = [1, 1]} : vector<9x128xf32> to vector<1x128xf32>
    %50 = vector.extract_strided_slice %34 {offsets = [6, 0], sizes = [1, 128], strides = [1, 1]} : vector<9x128xf32> to vector<1x128xf32>
    %51 = vector.extract_strided_slice %34 {offsets = [7, 0], sizes = [1, 128], strides = [1, 1]} : vector<9x128xf32> to vector<1x128xf32>
    %52 = vector.extract_strided_slice %34 {offsets = [8, 0], sizes = [1, 128], strides = [1, 1]} : vector<9x128xf32> to vector<1x128xf32>
    %53 = vector.broadcast %35 : vector<8x1xf32> to vector<8x128xf32>
    %54 = vector.broadcast %44 : vector<1x128xf32> to vector<8x128xf32>
    %55 = arith.subf %53, %54 : vector<8x128xf32>
    %56 = math.absf %55 : vector<8x128xf32>
    %57 = vector.broadcast %36 : vector<8x1xf32> to vector<8x128xf32>
    %58 = vector.broadcast %45 : vector<1x128xf32> to vector<8x128xf32>
    %59 = arith.subf %57, %58 : vector<8x128xf32>
    %60 = math.absf %59 : vector<8x128xf32>
    %61 = arith.addf %56, %60 : vector<8x128xf32>
    %62 = vector.broadcast %37 : vector<8x1xf32> to vector<8x128xf32>
    %63 = vector.broadcast %46 : vector<1x128xf32> to vector<8x128xf32>
    %64 = arith.subf %62, %63 : vector<8x128xf32>
    %65 = math.absf %64 : vector<8x128xf32>
    %66 = arith.addf %61, %65 : vector<8x128xf32>
    %67 = vector.broadcast %38 : vector<8x1xf32> to vector<8x128xf32>
    %68 = vector.broadcast %47 : vector<1x128xf32> to vector<8x128xf32>
    %69 = arith.subf %67, %68 : vector<8x128xf32>
    %70 = math.absf %69 : vector<8x128xf32>
    %71 = arith.addf %66, %70 : vector<8x128xf32>
    %72 = vector.broadcast %39 : vector<8x1xf32> to vector<8x128xf32>
    %73 = vector.broadcast %48 : vector<1x128xf32> to vector<8x128xf32>
    %74 = arith.maximumf %72, %73 : vector<8x128xf32>
    %75 = vector.broadcast %40 : vector<8x1xf32> to vector<8x128xf32>
    %76 = vector.broadcast %49 : vector<1x128xf32> to vector<8x128xf32>
    %77 = arith.maximumf %75, %76 : vector<8x128xf32>
    %78 = vector.broadcast %41 : vector<8x1xf32> to vector<8x128xf32>
    %79 = vector.broadcast %50 : vector<1x128xf32> to vector<8x128xf32>
    %80 = arith.minimumf %78, %79 : vector<8x128xf32>
    %81 = vector.broadcast %42 : vector<8x1xf32> to vector<8x128xf32>
    %82 = vector.broadcast %51 : vector<1x128xf32> to vector<8x128xf32>
    %83 = arith.minimumf %81, %82 : vector<8x128xf32>
    %84 = arith.subf %80, %74 : vector<8x128xf32>
    %cst_17 = arith.constant 0.000000e+00 : f32
    %85 = vector.broadcast %cst_17 : f32 to vector<8x128xf32>
    %86 = arith.maximumf %84, %85 : vector<8x128xf32>
    %87 = arith.subf %83, %77 : vector<8x128xf32>
    %cst_18 = arith.constant 0.000000e+00 : f32
    %88 = vector.broadcast %cst_18 : f32 to vector<8x128xf32>
    %89 = arith.maximumf %87, %88 : vector<8x128xf32>
    %90 = arith.mulf %86, %89 : vector<8x128xf32>
    %91 = vector.broadcast %43 : vector<8x1xf32> to vector<8x128xf32>
    %92 = vector.broadcast %52 : vector<1x128xf32> to vector<8x128xf32>
    %93 = arith.addf %91, %92 : vector<8x128xf32>
    %94 = arith.subf %93, %90 : vector<8x128xf32>
    %95 = tpu.reciprocal %94 {approx = true} : vector<8x128xf32> -> vector<8x128xf32>
    %96 = arith.mulf %90, %95 : vector<8x128xf32>
    %97 = vector.broadcast %39 : vector<8x1xf32> to vector<8x128xf32>
    %98 = vector.broadcast %48 : vector<1x128xf32> to vector<8x128xf32>
    %99 = arith.minimumf %97, %98 : vector<8x128xf32>
    %100 = vector.broadcast %40 : vector<8x1xf32> to vector<8x128xf32>
    %101 = vector.broadcast %49 : vector<1x128xf32> to vector<8x128xf32>
    %102 = arith.minimumf %100, %101 : vector<8x128xf32>
    %103 = vector.broadcast %41 : vector<8x1xf32> to vector<8x128xf32>
    %104 = vector.broadcast %50 : vector<1x128xf32> to vector<8x128xf32>
    %105 = arith.maximumf %103, %104 : vector<8x128xf32>
    %106 = vector.broadcast %42 : vector<8x1xf32> to vector<8x128xf32>
    %107 = vector.broadcast %51 : vector<1x128xf32> to vector<8x128xf32>
    %108 = arith.maximumf %106, %107 : vector<8x128xf32>
    %109 = arith.subf %105, %99 : vector<8x128xf32>
    %cst_19 = arith.constant 0.000000e+00 : f32
    %110 = vector.broadcast %cst_19 : f32 to vector<8x128xf32>
    %111 = arith.maximumf %109, %110 : vector<8x128xf32>
    %112 = arith.subf %108, %102 : vector<8x128xf32>
    %cst_20 = arith.constant 0.000000e+00 : f32
    %113 = vector.broadcast %cst_20 : f32 to vector<8x128xf32>
    %114 = arith.maximumf %112, %113 : vector<8x128xf32>
    %115 = arith.mulf %111, %114 : vector<8x128xf32>
    %116 = arith.subf %115, %94 : vector<8x128xf32>
    %117 = tpu.reciprocal %115 {approx = true} : vector<8x128xf32> -> vector<8x128xf32>
    %118 = arith.mulf %116, %117 : vector<8x128xf32>
    %119 = arith.subf %96, %118 : vector<8x128xf32>
    %120 = arith.addf %32, %71 : vector<8x128xf32>
    %cst_21 = arith.constant 2.000000e+00 : f32
    %121 = vector.broadcast %cst_21 : f32 to vector<8x128xf32>
    %122 = arith.mulf %121, %119 : vector<8x128xf32>
    %123 = arith.subf %120, %122 : vector<8x128xf32>
    %c0_22 = arith.constant 0 : index
    %c0_23 = arith.constant 0 : index
    %124 = vector.load %arg5[%c0_22, %c0_23] : memref<8x128xf32, #tpu.memory_space<vmem>>, vector<8x128xf32>
    tpu.vector_store %arg5[%c0_22, %c0_23], %123 {strides = array<i32>} : memref<8x128xf32, #tpu.memory_space<vmem>>, vector<8x128xf32>,
    return
  }
  func.func @transform_0(%arg0: i32) -> (i32, i32) {
    %c0_i32 = arith.constant 0 : i32
    %c0_i32_0 = arith.constant 0 : i32
    return %arg0, %c0_i32 : i32, i32
  }
  func.func @transform_1(%arg0: i32) -> (i32, i32) {
    %c0_i32 = arith.constant 0 : i32
    %c0_i32_0 = arith.constant 0 : i32
    %c0_i32_1 = arith.constant 0 : i32
    return %c0_i32, %c0_i32_0 : i32, i32
  }
  func.func @transform_2(%arg0: i32) -> (i32, i32) {
    %c0_i32 = arith.constant 0 : i32
    %c0_i32_0 = arith.constant 0 : i32
    return %arg0, %c0_i32 : i32, i32
  }
  func.func @transform_3(%arg0: i32) -> (i32, i32) {
    %c0_i32 = arith.constant 0 : i32
    %c0_i32_0 = arith.constant 0 : i32
    %c0_i32_1 = arith.constant 0 : i32
    return %c0_i32, %c0_i32_0 : i32, i32
  }
  func.func @transform_4(%arg0: i32) -> (i32, i32) {
    %c0_i32 = arith.constant 0 : i32
    %c0_i32_0 = arith.constant 0 : i32
    return %arg0, %c0_i32 : i32, i32
  }
}

</mosaic_0001>

<llo_original>
// kernel: tpu_custom_call.1
$region0: #{tpu_custom_call.1}
  #allocation0 [shape = 'u32[]', space=smem, size = 0x4, offset = 0x4, fixed_abs, tag = 'smem constant byte address 0x4 - core index']
  #allocation1 [shape = 'u32[144,128]{1,0:T(1,128)}', space=vmem, size = 0x12000, scoped, tag = 'internal scratch']
  %s0 = inlined_call_operand.hbm [shape: f32[16,16], index: 0, kind: input, shape index: {}]
  %s1 = inlined_call_operand.hbm [shape: f32[16,128], index: 1, kind: input, shape index: {}]
  %s2 = inlined_call_operand.hbm [shape: f32[16,9], index: 2, kind: input, shape index: {}]
  %s3 = inlined_call_operand.hbm [shape: f32[9,128], index: 3, kind: input, shape index: {}]
  %s4 = inlined_call_operand.hbm [shape: f32[16,128], index: 4, kind: output, shape index: {}]
  %s5 = sld [smem:[#allocation0]]
  $region65: #{tpu_custom_call.1} parent=0
    _
  %s7 = ssub.s32 1, %s5
  %s8 = scalar_select 0, %s7, %s5
  $region1: #{tpu_custom_call.1} parent=0
    #allocation2 [shape = 'u8[8192]{0}', space=vmem, size = 0x2000, scoped, tag = 'input window, operand 0']
    #allocation3 [shape = 's32[2]{0}', space=sflag, size = 0x8, scoped, tag = 'scoped memory for tpu_custom_call.1']
    #allocation4 [shape = 's32[2]{0}', space=sflag, size = 0x8, scoped, tag = 'scoped memory for tpu_custom_call.1']
    #allocation5 [shape = 'u8[8192]{0}', space=vmem, size = 0x2000, scoped, tag = 'input window, operand 1, single buffered']
    #allocation6 [shape = 's32[1]{0}', space=sflag, size = 0x4, scoped, tag = 'scoped memory for tpu_custom_call.1']
    #allocation7 [shape = 'u8[8192]{0}', space=vmem, size = 0x2000, scoped, tag = 'input window, operand 2']
    #allocation8 [shape = 'u8[8192]{0}', space=vmem, size = 0x2000, scoped, tag = 'input window, operand 3, single buffered']
    #allocation9 [shape = 'u8[8192]{0}', space=vmem, size = 0x2000, scoped, tag = 'output window, operand 0']
    %9 = vsyncpa [#allocation3], 0
    %s10 = scalar_lea.sflag [#allocation3], 1
    %11 = vsyncpa %s10, 0
    %12 = vsyncpa [#allocation6], 0
    %13 = vsyncpa [#allocation4], 0
    %s14 = scalar_lea.sflag [#allocation4], 1
    %15 = vsyncpa %s14, 0
    loop: start=0, step=1, limit=4
    $region2: #{tpu_custom_call.1} parent=1 // loop_pre_header
      _
    $region3: #{tpu_custom_call.1} parent=1 // loop_header
      %s17 = sphi 0, %s21
      %p18 = scmp.ge.s32.totalorder %s17, 4
      %s27 = sphi 0, %s29
      %s30 = sphi 0, %s27
      %s31 = sphi 0, %s30
      %s47 = sphi 0, %s31
      %s51 = sphi 0, %s51
      %s53 = sphi 0, %s51
      %s54 = sphi 0, %s53
      %s68 = sphi 0, %s54
      %s74 = sphi 0, %s76
      %s77 = sphi 0, %s74
      %s78 = sphi 0, %s77
      %s94 = sphi 0, %s78
      %s98 = sphi 0, %s98
      %s100 = sphi 0, %s98
      %s101 = sphi 0, %s100
      %s115 = sphi 0, %s101
      %s121 = sphi 0, %s123
      %s124 = sphi 0, %s121
      %s125 = sphi 0, %s124
      %s141 = sphi 0, %s125
    $region4: #{tpu_custom_call.1} parent=1 // loop_header_branch
      %20 = sbr.rel (%p18) target = $region8
    $region5: #{tpu_custom_call.1} parent=1 // loop_body
      %s22 = ssub.s32 %s17, 1
      %s23 = ssub.s32 %s17, 2
      %s24 = sadd.s32 %s17, 1
      %s25 = ssub.s32 %s17, %s24
      %p26 = scmp.eq.s32.totalorder %s25, 0
      %s28 = sadd.s32 %s27, 1
      %s29 = scalar_select %p26, %s27, %s28
      %p32 = pneg %p26
      %p33 = scmp.eq.s32.totalorder %s17, 1
      %p34 = por %p32, %p33
      %p35 = scmp.ne.s32.totalorder %s27, %s30
      %p36 = scmp.eq.s32.totalorder %s17, 0
      %p37 = por %p35, %p36
      %p38 = scmp.ne.s32.totalorder %s27, %s30
      %p39 = scmp.eq.s32.totalorder %s22, 1
      %p40 = por %p38, %p39
      %p41 = scmp.ne.s32.totalorder %s30, %s31
      %p42 = scmp.eq.s32.totalorder %s22, 0
      %p43 = por %p41, %p42
      %p44 = scmp.ne.s32.totalorder %s30, %s31
      %p45 = scmp.eq.s32.totalorder %s23, 1
      %p46 = por %p44, %p45
      %p48 = scmp.ne.s32.totalorder %s31, %s47
      %p49 = scmp.eq.s32.totalorder %s23, 0
      %p50 = por %p48, %p49
      %s52 = sadd.s32 %s51, 1
      %p55 = scmp.eq.s32.totalorder %s17, 1
      %p56 = scmp.ne.s32.totalorder %s51, %s53
      %p57 = scmp.eq.s32.totalorder %s17, 0
      %p58 = por %p56, %p57
      %p59 = scmp.ne.s32.totalorder %s51, %s53
      %p60 = scmp.eq.s32.totalorder %s22, 1
      %p61 = por %p59, %p60
      %p62 = scmp.ne.s32.totalorder %s53, %s54
      %p63 = scmp.eq.s32.totalorder %s22, 0
      %p64 = por %p62, %p63
      %p65 = scmp.ne.s32.totalorder %s53, %s54
      %p66 = scmp.eq.s32.totalorder %s23, 1
      %p67 = por %p65, %p66
      %p69 = scmp.ne.s32.totalorder %s54, %s68
      %p70 = scmp.eq.s32.totalorder %s23, 0
      %p71 = por %p69, %p70
      %s72 = ssub.s32 %s17, %s24
      %p73 = scmp.eq.s32.totalorder %s72, 0
      %s75 = sadd.s32 %s74, 1
      %s76 = scalar_select %p73, %s74, %s75
      %p79 = pneg %p73
      %p80 = scmp.eq.s32.totalorder %s17, 1
      %p81 = por %p79, %p80
      %p82 = scmp.ne.s32.totalorder %s74, %s77
      %p83 = scmp.eq.s32.totalorder %s17, 0
      %p84 = por %p82, %p83
      %p85 = scmp.ne.s32.totalorder %s74, %s77
      %p86 = scmp.eq.s32.totalorder %s22, 1
      %p87 = por %p85, %p86
      %p88 = scmp.ne.s32.totalorder %s77, %s78
      %p89 = scmp.eq.s32.totalorder %s22, 0
      %p90 = por %p88, %p89
      %p91 = scmp.ne.s32.totalorder %s77, %s78
      %p92 = scmp.eq.s32.totalorder %s23, 1
      %p93 = por %p91, %p92
      %p95 = scmp.ne.s32.totalorder %s78, %s94
      %p96 = scmp.eq.s32.totalorder %s23, 0
      %p97 = por %p95, %p96
      %s99 = sadd.s32 %s98, 1
      %p102 = scmp.eq.s32.totalorder %s17, 1
      %p103 = scmp.ne.s32.totalorder %s98, %s100
      %p104 = scmp.eq.s32.totalorder %s17, 0
      %p105 = por %p103, %p104
      %p106 = scmp.ne.s32.totalorder %s98, %s100
      %p107 = scmp.eq.s32.totalorder %s22, 1
      %p108 = por %p106, %p107
      %p109 = scmp.ne.s32.totalorder %s100, %s101
      %p110 = scmp.eq.s32.totalorder %s22, 0
      %p111 = por %p109, %p110
      %p112 = scmp.ne.s32.totalorder %s100, %s101
      %p113 = scmp.eq.s32.totalorder %s23, 1
      %p114 = por %p112, %p113
      %p116 = scmp.ne.s32.totalorder %s101, %s115
      %p117 = scmp.eq.s32.totalorder %s23, 0
      %p118 = por %p116, %p117
      %s119 = ssub.s32 %s17, %s24
      %p120 = scmp.eq.s32.totalorder %s119, 0
      %s122 = sadd.s32 %s121, 1
      %s123 = scalar_select %p120, %s121, %s122
      %p126 = pneg %p120
      %p127 = scmp.eq.s32.totalorder %s17, 1
      %p128 = por %p126, %p127
      %p129 = scmp.ne.s32.totalorder %s121, %s124
      %p130 = scmp.eq.s32.totalorder %s17, 0
      %p131 = por %p129, %p130
      %p132 = scmp.ne.s32.totalorder %s121, %s124
      %p133 = scmp.eq.s32.totalorder %s22, 1
      %p134 = por %p132, %p133
      %p135 = scmp.ne.s32.totalorder %s124, %s125
      %p136 = scmp.eq.s32.totalorder %s22, 0
      %p137 = por %p135, %p136
      %p138 = scmp.ne.s32.totalorder %s124, %s125
      %p139 = scmp.eq.s32.totalorder %s23, 1
      %p140 = por %p138, %p139
      %p142 = scmp.ne.s32.totalorder %s125, %s141
      %p143 = scmp.eq.s32.totalorder %s23, 0
      %p144 = por %p142, %p143
      %p145 = scmp.le.s32.totalorder 1, %s17
      %p146 = scmp.lt.s32.totalorder %s17, 3
      %p147 = pnand %p145, %p146
      %p148 = pneg %p147
      // Predicated region
      $region9: #{tpu_custom_call.1} parent=5 // pred_check
        _
      $region10: #{tpu_custom_call.1} parent=5 // pred_check_branch
        %150 = sbr.rel (%p147) target = $region12
      $region11: #{tpu_custom_call.1} parent=5 // pred_region
        %s151 = ssub.s32 %s17, 1
        // Predicated region
        $region13: #{tpu_custom_call.1} parent=11 // pred_check
          %p152 = pneg %p64
        $region14: #{tpu_custom_call.1} parent=11 // pred_check_branch
          %154 = sbr.rel (%p152) target = $region16
        $region15: #{tpu_custom_call.1} parent=11 // pred_region
          %s156 = ssub.s32 256, 256
          %157 = vsyncadd [#allocation6], %s156
          %s158 = sshll.u32 [#allocation5], 4
          %s159 = int_to_ptr.vmem [resolvable:$true] %s158
          %164 = dma.hbm_to_vmem [thread:$0]  %s1, 256, %s159, [#allocation6], 128, 128, 8
        $region16: #{tpu_custom_call.1} parent=11 // pred_fallthru
          _
        // Predicated region
        $region17: #{tpu_custom_call.1} parent=11 // pred_check
          %p165 = pneg %p111
        $region18: #{tpu_custom_call.1} parent=11 // pred_check_branch
          %167 = sbr.rel (%p165) target = $region20
        $region19: #{tpu_custom_call.1} parent=11 // pred_region
          %s169 = ssub.s32 256, 256
          %170 = vsyncadd [#allocation6], %s169
          %s171 = sshll.u32 [#allocation8], 4
          %s172 = int_to_ptr.vmem [resolvable:$true] %s171
          %177 = dma.hbm_to_vmem [thread:$0]  %s3, 256, %s172, [#allocation6], 128, 128, 8
        $region20: #{tpu_custom_call.1} parent=11 // pred_fallthru
          _
      $region12: #{tpu_custom_call.1} parent=5 // pred_fallthru
        _
      %p178 = scmp.lt.s32.totalorder %s17, 2
      // Predicated region
      $region21: #{tpu_custom_call.1} parent=5 // pred_check
        %p179 = pneg %p178
      $region22: #{tpu_custom_call.1} parent=5 // pred_check_branch
        %181 = sbr.rel (%p179) target = $region24
      $region23: #{tpu_custom_call.1} parent=5 // pred_region
        // Predicated region
        $region25: #{tpu_custom_call.1} parent=23 // pred_check
          %p182 = pneg %p37
        $region26: #{tpu_custom_call.1} parent=23 // pred_check_branch
          %184 = sbr.rel (%p182) target = $region28
        $region27: #{tpu_custom_call.1} parent=23 // pred_region
          %s185 = sand.u32 %s17, 1
          %s186 = scalar_lea.sflag [#allocation3], %s185
          %s187 = sand.u32 %s27, 1
          %s188 = smul.addr %s187, 8
          %s189 = scalar_lea.vmem [#allocation2], %s188
          %s191 = ssub.s32 128, 128
          %192 = vsyncadd %s186, %s191
          %s193 = smul.addr %s17, 128
          %s194 = scalar_lea.hbm %s0, %s193
          %s196 = sshll.u32 %s189, 4
          %s197 = int_to_ptr.vmem [resolvable:$true] %s196
          %199 = dma.hbm_to_vmem [thread:$0]  %s194, 128, %s197, %s186
        $region28: #{tpu_custom_call.1} parent=23 // pred_fallthru
          _
        // Predicated region
        $region29: #{tpu_custom_call.1} parent=23 // pred_check
          %p200 = pneg %p84
        $region30: #{tpu_custom_call.1} parent=23 // pred_check_branch
          %202 = sbr.rel (%p200) target = $region32
        $region31: #{tpu_custom_call.1} parent=23 // pred_region
          %s203 = sand.u32 %s17, 1
          %s204 = scalar_lea.sflag [#allocation3], %s203
          %s205 = sand.u32 %s74, 1
          %s206 = smul.addr %s205, 8
          %s207 = scalar_lea.vmem [#allocation7], %s206
          %s209 = ssub.s32 128, 128
          %210 = vsyncadd %s204, %s209
          %s211 = smul.addr %s17, 128
          %s212 = scalar_lea.hbm %s2, %s211
          %s214 = sshll.u32 %s207, 4
          %s215 = int_to_ptr.vmem [resolvable:$true] %s214
          %217 = dma.hbm_to_vmem [thread:$0]  %s212, 128, %s215, %s204
        $region32: #{tpu_custom_call.1} parent=23 // pred_fallthru
          _
      $region24: #{tpu_custom_call.1} parent=5 // pred_fallthru
        _
      %p218 = scmp.le.s32.totalorder 1, %s17
      %p219 = scmp.lt.s32.totalorder %s17, 3
      %p220 = pnand %p218, %p219
      %p221 = pneg %p220
      // Predicated region
      $region33: #{tpu_custom_call.1} parent=5 // pred_check
        _
      $region34: #{tpu_custom_call.1} parent=5 // pred_check_branch
        %223 = sbr.rel (%p220) target = $region36
      $region35: #{tpu_custom_call.1} parent=5 // pred_region
        %s224 = ssub.s32 %s17, 1
        %s225 = sand.u32 %s22, 1
        %s226 = scalar_lea.sflag [#allocation3], %s225
        %s227 = sand.u32 %s30, 1
        %s228 = smul.addr %s227, 8
        %s229 = scalar_lea.vmem [#allocation2], %s228
        // Predicated region
        $region37: #{tpu_custom_call.1} parent=35 // pred_check
          %p230 = pneg %p43
        $region38: #{tpu_custom_call.1} parent=35 // pred_check_branch
          %232 = sbr.rel (%p230) target = $region40
        $region39: #{tpu_custom_call.1} parent=35 // pred_region
          %233 = dma.done %s226, 128
        $region40: #{tpu_custom_call.1} parent=35 // pred_fallthru
          _
        // Predicated region
        $region41: #{tpu_custom_call.1} parent=35 // pred_check
          %p234 = pneg %p64
        $region42: #{tpu_custom_call.1} parent=35 // pred_check_branch
          %236 = sbr.rel (%p234) target = $region44
        $region43: #{tpu_custom_call.1} parent=35 // pred_region
          %237 = dma.done [#allocation6], 256
        $region44: #{tpu_custom_call.1} parent=35 // pred_fallthru
          _
        %s238 = sand.u32 %s22, 1
        %s239 = scalar_lea.sflag [#allocation3], %s238
        %s240 = sand.u32 %s77, 1
        %s241 = smul.addr %s240, 8
        %s242 = scalar_lea.vmem [#allocation7], %s241
        // Predicated region
        $region45: #{tpu_custom_call.1} parent=35 // pred_check
          %p243 = pneg %p90
        $region46: #{tpu_custom_call.1} parent=35 // pred_check_branch
          %245 = sbr.rel (%p243) target = $region48
        $region47: #{tpu_custom_call.1} parent=35 // pred_region
          %246 = dma.done %s239, 128
        $region48: #{tpu_custom_call.1} parent=35 // pred_fallthru
          _
        // Predicated region
        $region49: #{tpu_custom_call.1} parent=35 // pred_check
          %p247 = pneg %p111
        $region50: #{tpu_custom_call.1} parent=35 // pred_check_branch
          %249 = sbr.rel (%p247) target = $region52
        $region51: #{tpu_custom_call.1} parent=35 // pred_region
          %250 = dma.done [#allocation6], 256
        $region52: #{tpu_custom_call.1} parent=35 // pred_fallthru
          _
        %s251 = sand.u32 %s22, 1
        %s252 = scalar_lea.sflag [#allocation3], %s251
        %s253 = sand.u32 %s30, 1
        %s254 = smul.addr %s253, 8
        %s255 = scalar_lea.vmem [#allocation2], %s254
        %p256 = pneg %p43
        %p257 = pneg %p40
        %p258 = pneg %p64
        %p259 = pneg %p61
        %s260 = sand.u32 %s22, 1
        %s261 = scalar_lea.sflag [#allocation3], %s260
        %s262 = sand.u32 %s77, 1
        %s263 = smul.addr %s262, 8
        %s264 = scalar_lea.vmem [#allocation7], %s263
        %p265 = pneg %p90
        %p266 = pneg %p87
        %p267 = pneg %p111
        %p268 = pneg %p108
        %p269 = pneg %p137
        %p270 = pneg %p134
        %s271 = sand.u32 %s124, 1
        %s272 = scalar_lea.sflag [#allocation4], %s271
        %s273 = sand.u32 %s124, 1
        %s274 = smul.addr %s273, 8
        %s275 = scalar_lea.vmem [#allocation9], %s274
        %v276 = vld [vmem:[%s229] sm:$0xff]
        %v277 = vxor.u32 %v276, 2147483648
        %v278 = vmul.f32 %v277, 1.442695
        %v279 = vpow.pop %v278
        %v280 = vadd.f32 %v279, 1.0
        %v281 = vrcp.pop %v280
        %v282 = vmul.f32 1.0, %v281
        %v283 = vmul.f32 %v282, %v282
        %v284 = vmul.f32 %v283, 0.75
        %v285 = vsub.f32 1.0, %v282
        %v286 = vadd.f32 %v285, 1e-08
        %v287 = vlog2.pop %v286
        %v288 = vmul.f32 %v287, 0.6931472
        %v289 = vsub.f32 0.0, %v288
        %v290 = vmul.f32 %v284, %v289
        %v291 = vmul.f32 %v285, %v285
        %v292 = vmul.f32 %v291, 0.25
        %v293 = vadd.f32 %v282, 1e-08
        %v294 = vlog2.pop %v293
        %v295 = vmul.f32 %v294, 0.6931472
        %v296 = vsub.f32 0.0, %v295
        %v297 = vmul.f32 %v292, %v296
        %v298 = vsub.f32 %v297, %v290
        %v299 = vmul.f32 %v298, 2.0
        %v300 = vld [vmem:[#allocation5] sm:$0xff]
        %v301 = vld [vmem:[#allocation5 + $0x8] sm:$0xff]
        %v302 = vld [vmem:[%s242] sm:$0xff]
        %v303 = vld [vmem:[#allocation8] sm:$0xff]
        %v304 = vld [vmem:[#allocation8 + $0x8] sm:$0x1]
        %306 = vset.pattern.permute.xlu0 0
        %307 = vperm.xlu0 %306, %v302
        %v308 = vpop.permute.xlu0 %307
        %v310 = vlaneseq
        %v311 = vshrl.u32 %v310, 7
        %v312 = vsub.s32 0, %v311
        %v313 = vrot.slane %v303, %v312
        %v314 = vsub.f32 %v308, %v313
        %v315 = vand.u32 2147483647, %v314
        %316 = vset.pattern.permute.xlu0 1
        %317 = vperm.xlu0 %316, %v302
        %v318 = vpop.permute.xlu0 %317
        %v320 = vlaneseq
        %v321 = vshrl.u32 %v320, 7
        %v322 = vsub.s32 1, %v321
        %v323 = vrot.slane %v303, %v322
        %v324 = vsub.f32 %v318, %v323
        %v325 = vand.u32 2147483647, %v324
        %v326 = vadd.f32 %v315, %v325
        %327 = vset.pattern.permute.xlu0 2
        %328 = vperm.xlu0 %327, %v302
        %v329 = vpop.permute.xlu0 %328
        %v331 = vlaneseq
        %v332 = vshrl.u32 %v331, 7
        %v333 = vsub.s32 2, %v332
        %v334 = vrot.slane %v303, %v333
        %v335 = vsub.f32 %v329, %v334
        %v336 = vand.u32 2147483647, %v335
        %v337 = vadd.f32 %v326, %v336
        %338 = vset.pattern.permute.xlu0 3
        %339 = vperm.xlu0 %338, %v302
        %v340 = vpop.permute.xlu0 %339
        %v342 = vlaneseq
        %v343 = vshrl.u32 %v342, 7
        %v344 = vsub.s32 3, %v343
        %v345 = vrot.slane %v303, %v344
        %v346 = vsub.f32 %v340, %v345
        %v347 = vand.u32 2147483647, %v346
        %v348 = vadd.f32 %v337, %v347
        %349 = vset.pattern.permute.xlu0 4
        %350 = vperm.xlu0 %349, %v302
        %v351 = vpop.permute.xlu0 %350
        %v353 = vlaneseq
        %v354 = vshrl.u32 %v353, 7
        %v355 = vsub.s32 4, %v354
        %v356 = vrot.slane %v303, %v355
        %v357 = vmax.f32 %v351, %v356
        %358 = vset.pattern.permute.xlu0 5
        %359 = vperm.xlu0 %358, %v302
        %v360 = vpop.permute.xlu0 %359
        %v362 = vlaneseq
        %v363 = vshrl.u32 %v362, 7
        %v364 = vsub.s32 5, %v363
        %v365 = vrot.slane %v303, %v364
        %v366 = vmax.f32 %v360, %v365
        %367 = vset.pattern.permute.xlu0 6
        %368 = vperm.xlu0 %367, %v302
        %v369 = vpop.permute.xlu0 %368
        %v371 = vlaneseq
        %v372 = vshrl.u32 %v371, 7
        %v373 = vsub.s32 6, %v372
        %v374 = vrot.slane %v303, %v373
        %v375 = vmin.f32 %v369, %v374
        %376 = vset.pattern.permute.xlu0 7
        %377 = vperm.xlu0 %376, %v302
        %v378 = vpop.permute.xlu0 %377
        %v380 = vlaneseq
        %v381 = vshrl.u32 %v380, 7
        %v382 = vsub.s32 7, %v381
        %v383 = vrot.slane %v303, %v382
        %v384 = vmin.f32 %v378, %v383
        %v385 = vsub.f32 %v375, %v357
        %v386 = vmax.f32 %v385, 0.0
        %v387 = vsub.f32 %v384, %v366
        %v388 = vmax.f32 %v387, 0.0
        %v389 = vmul.f32 %v386, %v388
        %390 = vset.pattern.permute.xlu0 8
        %391 = vperm.xlu0 %390, %v302
        %v392 = vpop.permute.xlu0 %391
        %v394 = vlaneseq
        %v395 = vshrl.u32 %v394, 7
        %v396 = vsub.s32 0, %v395
        %v397 = vrot.slane %v304, %v396
        %v398 = vadd.f32 %v392, %v397
        %v399 = vsub.f32 %v398, %v389
        %v400 = vrcp.pop %v399
        %v401 = vmul.f32 %v389, %v400
        %v402 = vmin.f32 %v351, %v356
        %v403 = vmin.f32 %v360, %v365
        %v404 = vmax.f32 %v369, %v374
        %v405 = vmax.f32 %v378, %v383
        %v406 = vsub.f32 %v404, %v402
        %v407 = vmax.f32 %v406, 0.0
        %v408 = vsub.f32 %v405, %v403
        %v409 = vmax.f32 %v408, 0.0
        %v410 = vmul.f32 %v407, %v409
        %v411 = vsub.f32 %v410, %v399
        %v412 = vrcp.pop %v410
        %v413 = vmul.f32 %v411, %v412
        %v414 = vsub.f32 %v401, %v413
        %vm415 = vcmask 130048
        %v417 = vsel %vm415, %v299, 0
        %419 = vmatprep.subr.mxu0 0.0
        %420 = vmatpush1.msra.mxu0 %v300
        %421 = vmatprep.subr.mxu0 0.0
        %422 = vmatpush1.msra.mxu0 %v301
        %423 = vmatprep.subr.mxu0 0.0
        %424 = vmatpush1.msra.mxu0 0.0
        %425 = vmatprep.subr.mxu0 0.0
        %426 = vmatpush1.msra.mxu0 0.0
        %427 = vmatprep.subr.mxu0 0.0
        %428 = vmatpush1.msra.mxu0 0.0
        %429 = vmatprep.subr.mxu0 0.0
        %430 = vmatpush1.msra.mxu0 0.0
        %431 = vmatprep.subr.mxu0 0.0
        %432 = vmatpush1.msra.mxu0 0.0
        %433 = vmatprep.subr.mxu0 0.0
        %434 = vmatpush1.msra.mxu0 0.0
        %435 = vmatprep.subr.mxu0 0.0
        %436 = vmatpush1.msra.mxu0 0.0
        %437 = vmatprep.subr.mxu0 0.0
        %438 = vmatpush1.msra.mxu0 0.0
        %439 = vmatprep.subr.mxu0 0.0
        %440 = vmatpush1.msra.mxu0 0.0
        %441 = vmatprep.subr.mxu0 0.0
        %442 = vmatpush1.msra.mxu0 0.0
        %443 = vmatprep.subr.mxu0 0.0
        %444 = vmatpush1.msra.mxu0 0.0
        %445 = vmatprep.subr.mxu0 0.0
        %446 = vmatpush1.msra.mxu0 0.0
        %447 = vmatprep.subr.mxu0 0.0
        %448 = vmatpush1.msra.mxu0 0.0
        %449 = vmatprep.subr.mxu0 0.0
        %450 = vmatpush1.msra.mxu0 0.0
        %451 = vmatprep.subr.mxu0 0.0
        %452 = vmatpush1.msra.mxu0 0.0
        %453 = vmatprep.subr.mxu0 0.0
        %454 = vmatpush1.msra.mxu0 0.0
        %455 = vmatprep.subr.mxu0 0.0
        %456 = vmatpush1.msra.mxu0 0.0
        %457 = vmatprep.subr.mxu0 0.0
        %458 = vmatpush1.msra.mxu0 0.0
        %459 = vmatprep.subr.mxu0 0.0
        %460 = vmatpush1.msra.mxu0 0.0
        %461 = vmatprep.subr.mxu0 0.0
        %462 = vmatpush1.msra.mxu0 0.0
        %463 = vmatprep.subr.mxu0 0.0
        %464 = vmatpush1.msra.mxu0 0.0
        %465 = vmatprep.subr.mxu0 0.0
        %466 = vmatpush1.msra.mxu0 0.0
        %467 = vmatprep.subr.mxu0 0.0
        %468 = vmatpush1.msra.mxu0 0.0
        %469 = vmatprep.subr.mxu0 0.0
        %470 = vmatpush1.msra.mxu0 0.0
        %471 = vmatprep.subr.mxu0 0.0
        %472 = vmatpush1.msra.mxu0 0.0
        %473 = vmatprep.subr.mxu0 0.0
        %474 = vmatpush1.msra.mxu0 0.0
        %475 = vmatprep.subr.mxu0 0.0
        %476 = vmatpush1.msra.mxu0 0.0
        %477 = vmatprep.subr.mxu0 0.0
        %478 = vmatpush1.msra.mxu0 0.0
        %479 = vmatprep.subr.mxu0 0.0
        %480 = vmatpush1.msra.mxu0 0.0
        %481 = vmatprep.subr.mxu0 0.0
        %482 = vmatpush1.msra.mxu0 0.0
        %483 = vmatprep.mubr.f32.mxu0 0.0
        %484 = vmatmul.mubr.f32.gmra.mrb[0].mxu0 %v417
        %v485 = vpop.f32.mrb[0].mxu0
        %v486 = vadd.f32 %v348, %v485
        %v487 = vpop.f32.mrb[0].mxu0
        %488 = vdwg.mxu0
        %v489 = vmul.f32 %v414, 2.0
        %v490 = vsub.f32 %v486, %v489
        %491 = vst [vmem:[%s275] sm:$0xff] %v490
        %s492 = sand.u32 %s124, 1
        %s493 = scalar_lea.sflag [#allocation4], %s492
        %s494 = sand.u32 %s124, 1
        %s495 = smul.addr %s494, 8
        %s496 = scalar_lea.vmem [#allocation9], %s495
        // Predicated region
        $region53: #{tpu_custom_call.1} parent=35 // pred_check
          %p497 = pneg %p134
        $region54: #{tpu_custom_call.1} parent=35 // pred_check_branch
          %499 = sbr.rel (%p497) target = $region56
        $region55: #{tpu_custom_call.1} parent=35 // pred_region
          %s501 = ssub.s32 128, 128
          %502 = vsyncadd %s493, %s501
          %s503 = smul.addr %s22, 128
          %s504 = scalar_lea.hbm %s4, %s503
          %s506 = sshll.u32 %s496, 4
          %s507 = int_to_ptr.vmem [resolvable:$true] %s506
          %509 = dma.vmem_to_hbm [thread:$0]  %s507, 128, %s504, %s493
        $region56: #{tpu_custom_call.1} parent=35 // pred_fallthru
          _
      $region36: #{tpu_custom_call.1} parent=5 // pred_fallthru
        _
      %p510 = scmp.le.s32.totalorder 2, %s17
      // Predicated region
      $region57: #{tpu_custom_call.1} parent=5 // pred_check
        %p511 = pneg %p510
      $region58: #{tpu_custom_call.1} parent=5 // pred_check_branch
        %513 = sbr.rel (%p511) target = $region60
      $region59: #{tpu_custom_call.1} parent=5 // pred_region
        %s514 = ssub.s32 %s17, 2
        // Predicated region
        $region61: #{tpu_custom_call.1} parent=59 // pred_check
          %p515 = pneg %p140
        $region62: #{tpu_custom_call.1} parent=59 // pred_check_branch
          %517 = sbr.rel (%p515) target = $region64
        $region63: #{tpu_custom_call.1} parent=59 // pred_region
          %s518 = sand.u32 %s125, 1
          %s519 = scalar_lea.sflag [#allocation4], %s518
          %s520 = sand.u32 %s125, 1
          %s521 = smul.addr %s520, 8
          %s522 = scalar_lea.vmem [#allocation9], %s521
          %523 = dma.done %s519, 128
        $region64: #{tpu_custom_call.1} parent=59 // pred_fallthru
          _
      $region60: #{tpu_custom_call.1} parent=5 // pred_fallthru
        _
    $region6: #{tpu_custom_call.1} parent=1 // loop_footer
      %s21 = sadd.s32 1, %s17
    $region7: #{tpu_custom_call.1} parent=1 // loop_footer_branch
      %16 = sbr.rel target = $region3
    $region8: #{tpu_custom_call.1} parent=1 // loop_exit
      _
    %524 = vsyncpa [#allocation3], 1
    %s525 = scalar_lea.sflag [#allocation3], 1
    %526 = vsyncpa %s525, 1
    %527 = vsyncpa [#allocation6], 1
    %528 = vsyncpa [#allocation4], 1
    %s529 = scalar_lea.sflag [#allocation4], 1
    %530 = vsyncpa %s529, 1

</llo_original>
